<compile_context>
chip_gen: v5e
topology: v5e:2x2
jax: 0.10.0
libtpu: 0.0.40
codegen_flags: <defaults>
</compile_context>

<pallas_src>
import jax
import jax.numpy as jnp
from jax import lax
from jax.experimental import pallas as pl
from jax.experimental.pallas import tpu as pltpu

INPUT_SIZE = 10
HIDDEN_SIZE = 64
OUTPUT_SIZE = 128

G = HIDDEN_SIZE    # per-gate lane width (native, no padding): 4*G = 256 lanes
BP = 8             # batch padded to the f32 sublane height


def lstm_fc_kernel(x_ref, w_ih_ref, w_hh_ref, b_ref, w_fc_ref, b_fc_ref,
                   out_ref, gx_ref):
    """All f32.
       x_ref   : (T*BP, I)    time-major rows, batch padded to BP
       w_ih_ref: (I, 4*G)     gate order i|f|o|g, i/f/o columns pre-scaled by 0.5
       w_hh_ref: (G, 4*G)     same layout / scaling
       b_ref   : (1, 4*G)     b_ih + b_hh, same layout / scaling
       w_fc_ref: (G, O)
       b_fc_ref: (1, O)
       out_ref : (BP, O)
       gx_ref  : (T*BP, 4*G)  VMEM scratch for the hoisted input projection
    """
    T = x_ref.shape[0] // BP

    # Input projection (+ bias) for ALL timesteps in one MXU matmul, stored to
    # VMEM scratch so the unrolled recurrence reads cheap 8-row slices instead
    # of keeping ~16 vregs live across the whole loop.
    gx_ref[...] = (
        jnp.dot(x_ref[...], w_ih_ref[...], preferred_element_type=jnp.float32)
        + b_ref[...]
    )

    h = jnp.zeros((BP, G), jnp.float32)
    c = jnp.zeros((BP, G), jnp.float32)

    # Fully unrolled serial recurrence (T static and small). w_hh is read from
    # its ref at the point of use each step rather than held live in vregs.
    for t in range(T):
        pre = gx_ref[t * BP:(t + 1) * BP, :] + jnp.dot(
            h, w_hh_ref[...], preferred_element_type=jnp.float32)   # (BP, 4*G)

        # i|f|o columns were pre-scaled by 0.5, so one tanh over the whole slab
        # gives tanh(z/2) for i/f/o and tanh(z) for g (single EUP launch).
        tg = jnp.tanh(pre)
        sig = 0.5 * tg[:, 0:3 * G] + 0.5        # = sigmoid(z) for the i|f|o slab
        i_g = sig[:, 0:G]
        f_g = sig[:, G:2 * G]
        o_g = sig[:, 2 * G:3 * G]
        g_g = tg[:, 3 * G:4 * G]

        c = f_g * c + i_g * g_g
        h = o_g * jnp.tanh(c)

    out_ref[...] = (
        jnp.dot(h, w_fc_ref[...], preferred_element_type=jnp.float32)
        + b_fc_ref[...]
    )


def prepare_params(params):
    """One-time weight preprocessing (hoisted out of the per-call forward path).

    - transpose to (in, 4H) matmul layout
    - reorder PyTorch gate column blocks [i|f|g|o] -> [i|f|o|g] so the sigmoid
      slab (i|f|o) is lane-contiguous
    - fold b_ih + b_hh into a single bias row
    - pre-scale the i|f|o columns of W_ih, W_hh and the bias by 0.5 so sigmoid
      can be evaluated in-kernel as 0.5*tanh(pre)+0.5 with one tanh per step.

    Call once per weight update and reuse the result across forward calls.
    """
    H = HIDDEN_SIZE

    def reorder(w_t):   # (in, 4H) columns [i|f|g|o] -> [i|f|o|g]
        return jnp.concatenate(
            [w_t[:, 0:2 * H], w_t[:, 3 * H:4 * H], w_t[:, 2 * H:3 * H]], axis=1)

    col_scale = jnp.concatenate(
        [jnp.full((3 * H,), 0.5, jnp.float32), jnp.ones((H,), jnp.float32)])

    return {
        "w_ih": reorder(params["w_ih"].T) * col_scale,                       # (I, 4H)
        "w_hh": reorder(params["w_hh"].T) * col_scale,                       # (H, 4H)
        "b": reorder((params["b_ih"] + params["b_hh"])[None, :]) * col_scale,  # (1, 4H)
        "w_fc": params["w_fc"].T,                                            # (H, O)
        "b_fc": params["b_fc"][None, :],                                     # (1, O)
    }


@jax.jit
def time_series_model(x, prepped):
    """x: (B, T, I) float32 (batch_first). `prepped` = prepare_params(params).
    Returns (B, OUTPUT_SIZE)."""
    B, T, I = x.shape
    assert I == INPUT_SIZE and B <= BP

    # Tiny per-call x layout shuffle (time-major, batch padded to BP, flattened
    # over (T, BP)); under jit these fuse into a single copy.
    x_tm = jnp.transpose(x, (1, 0, 2))                      # (T, B, I)
    x_tm = jnp.pad(x_tm, ((0, 0), (0, BP - B), (0, 0)))     # (T, BP, I)
    x_flat = x_tm.reshape(T * BP, I)                        # (T*BP, I)

    vmem = pl.BlockSpec(memory_space=pltpu.MemorySpace.VMEM)
    out = pl.pallas_call(
        lstm_fc_kernel,
        out_shape=jax.ShapeDtypeStruct((BP, OUTPUT_SIZE), jnp.float32),
        in_specs=[vmem] * 6,
        out_specs=vmem,
        scratch_shapes=[pltpu.VMEM((T * BP, 4 * G), jnp.float32)],
    )(x_flat, prepped["w_ih"], prepped["w_hh"], prepped["b"],
      prepped["w_fc"], prepped["b_fc"])
    return out[:B]


def init_params(key):
    """Deterministic synthetic params matching nn.LSTM/nn.Linear shapes & init scale."""
    H, I, O = HIDDEN_SIZE, INPUT_SIZE, OUTPUT_SIZE
    k_lstm = 1.0 / jnp.sqrt(jnp.float32(H))
    k_fc = 1.0 / jnp.sqrt(jnp.float32(H))
    keys = jax.random.split(key, 6)
    return {
        "w_ih": jax.random.uniform(keys[0], (4 * H, I), jnp.float32, -k_lstm, k_lstm),
        "w_hh": jax.random.uniform(keys[1], (4 * H, H), jnp.float32, -k_lstm, k_lstm),
        "b_ih": jax.random.uniform(keys[2], (4 * H,), jnp.float32, -k_lstm, k_lstm),
        "b_hh": jax.random.uniform(keys[3], (4 * H,), jnp.float32, -k_lstm, k_lstm),
        "w_fc": jax.random.uniform(keys[4], (O, H), jnp.float32, -k_fc, k_fc),
        "b_fc": jax.random.uniform(keys[5], (O,), jnp.float32, -k_fc, k_fc),
    }


def reference_forward(x, params):
    """Pure-JAX reference reproducing PyTorch LSTM + Linear semantics (gate order i,f,g,o)."""
    B, T, _ = x.shape
    H = HIDDEN_SIZE
    hi = lax.Precision.HIGHEST
    w_ih_t = params["w_ih"].T
    w_hh_t = params["w_hh"].T
    b = params["b_ih"] + params["b_hh"]

    def step(carry, x_t):
        h, c = carry
        gates = (jnp.dot(x_t, w_ih_t, precision=hi)
                 + jnp.dot(h, w_hh_t, precision=hi) + b)
        i_g = jax.nn.sigmoid(gates[:, 0:H])
        f_g = jax.nn.sigmoid(gates[:, H:2 * H])
        g_g = jnp.tanh(gates[:, 2 * H:3 * H])
        o_g = jax.nn.sigmoid(gates[:, 3 * H:4 * H])
        c_new = f_g * c + i_g * g_g
        h_new = o_g * jnp.tanh(c_new)
        return (h_new, c_new), None

    h0 = jnp.zeros((B, H), jnp.float32)
    c0 = jnp.zeros((B, H), jnp.float32)
    (h_last, _), _ = lax.scan(step, (h0, c0), jnp.transpose(x, (1, 0, 2)))
    return jnp.dot(h_last, params["w_fc"].T, precision=hi) + params["b_fc"]


if __name__ == "__main__":
    key = jax.random.PRNGKey(0)
    k_x, k_p = jax.random.split(key)

    batch, seq = 2, 8
    x = jax.random.normal(k_x, (batch, seq, INPUT_SIZE), jnp.float32)
    params = init_params(k_p)

    prepped = prepare_params(params)      # one-time; reused across forward calls
    out = time_series_model(x, prepped)
    out = jax.block_until_ready(out)

    ref = reference_forward(x, params)
    assert out.shape == (batch, OUTPUT_SIZE)
    assert jnp.allclose(out, ref, rtol=1e-5, atol=1e-5), "Pallas kernel mismatch vs reference"

    print("KERNEL_OK")
</pallas_src>

<mosaic_0001>
module attributes {stable_mosaic.version = 11 : i64} {
  func.func @lstm_fc_kernel(%arg0: memref<64x10xf32, #tpu.memory_space<vmem>>, %arg1: memref<10x256xf32, #tpu.memory_space<vmem>>, %arg2: memref<64x256xf32, #tpu.memory_space<vmem>>, %arg3: memref<1x256xf32, #tpu.memory_space<vmem>>, %arg4: memref<64x128xf32, #tpu.memory_space<vmem>>, %arg5: memref<1x128xf32, #tpu.memory_space<vmem>>, %arg6: memref<8x128xf32, #tpu.memory_space<vmem>>, %arg7: memref<64x256xf32, #tpu.memory_space<vmem>>) attributes {dimension_semantics = [], scalar_prefetch = 0 : i64, scratch_operands = 1 : i64, tpu.core_type = #tpu.core_type<tc>} {
    %c0 = arith.constant 0 : index
    %c0_0 = arith.constant 0 : index
    %0 = vector.load %arg0[%c0, %c0_0] : memref<64x10xf32, #tpu.memory_space<vmem>>, vector<64x10xf32>
    %c0_1 = arith.constant 0 : index
    %c0_2 = arith.constant 0 : index
    %1 = vector.load %arg1[%c0_1, %c0_2] : memref<10x256xf32, #tpu.memory_space<vmem>>, vector<10x256xf32>
    %cst = arith.constant dense<0.000000e+00> : vector<64x256xf32>
    %2 = tpu.matmul %0, %1, %cst {dimension_numbers = #tpu.dot_dimension_numbers<[1], [0], [0], [1], [0, 0, 1, 1], [], []>} : vector<64x10xf32>, vector<10x256xf32>, vector<64x256xf32> -> vector<64x256xf32>
    %c0_3 = arith.constant 0 : index
    %c0_4 = arith.constant 0 : index
    %3 = vector.load %arg3[%c0_3, %c0_4] : memref<1x256xf32, #tpu.memory_space<vmem>>, vector<1x256xf32>
    %4 = vector.broadcast %3 : vector<1x256xf32> to vector<64x256xf32>
    %5 = arith.addf %2, %4 : vector<64x256xf32>
    %c0_5 = arith.constant 0 : index
    %c0_6 = arith.constant 0 : index
    %6 = vector.load %arg7[%c0_5, %c0_6] : memref<64x256xf32, #tpu.memory_space<vmem>>, vector<64x256xf32>
    tpu.vector_store %arg7[%c0_5, %c0_6], %5 {strides = array<i32>} : memref<64x256xf32, #tpu.memory_space<vmem>>, vector<64x256xf32>,
    %cst_7 = arith.constant 0.000000e+00 : f32
    %7 = vector.broadcast %cst_7 : f32 to vector<8x64xf32>
    %cst_8 = arith.constant 0.000000e+00 : f32
    %8 = vector.broadcast %cst_8 : f32 to vector<8x64xf32>
    %c0_9 = arith.constant 0 : index
    %c0_10 = arith.constant 0 : index
    %9 = vector.load %arg7[%c0_9, %c0_10] : memref<64x256xf32, #tpu.memory_space<vmem>>, vector<8x256xf32>
    %c0_11 = arith.constant 0 : index
    %c0_12 = arith.constant 0 : index
    %10 = vector.load %arg2[%c0_11, %c0_12] : memref<64x256xf32, #tpu.memory_space<vmem>>, vector<64x256xf32>
    %cst_13 = arith.constant dense<0.000000e+00> : vector<8x256xf32>
    %11 = tpu.matmul %7, %10, %cst_13 {dimension_numbers = #tpu.dot_dimension_numbers<[1], [0], [0], [1], [0, 0, 1, 1], [], []>} : vector<8x64xf32>, vector<64x256xf32>, vector<8x256xf32> -> vector<8x256xf32>
    %12 = arith.addf %9, %11 : vector<8x256xf32>
    %13 = math.tanh %12 : vector<8x256xf32>
    %14 = vector.extract_strided_slice %13 {offsets = [0, 0], sizes = [8, 192], strides = [1, 1]} : vector<8x256xf32> to vector<8x192xf32>
    %cst_14 = arith.constant 5.000000e-01 : f32
    %15 = vector.broadcast %cst_14 : f32 to vector<8x192xf32>
    %16 = arith.mulf %15, %14 : vector<8x192xf32>
    %cst_15 = arith.constant 5.000000e-01 : f32
    %17 = vector.broadcast %cst_15 : f32 to vector<8x192xf32>
    %18 = arith.addf %16, %17 : vector<8x192xf32>
    %19 = vector.extract_strided_slice %18 {offsets = [0, 0], sizes = [8, 64], strides = [1, 1]} : vector<8x192xf32> to vector<8x64xf32>
    %20 = vector.extract_strided_slice %18 {offsets = [0, 64], sizes = [8, 64], strides = [1, 1]} : vector<8x192xf32> to vector<8x64xf32>
    %21 = vector.extract_strided_slice %18 {offsets = [0, 128], sizes = [8, 64], strides = [1, 1]} : vector<8x192xf32> to vector<8x64xf32>
    %22 = vector.extract_strided_slice %13 {offsets = [0, 192], sizes = [8, 64], strides = [1, 1]} : vector<8x256xf32> to vector<8x64xf32>
    %23 = arith.mulf %20, %8 : vector<8x64xf32>
    %24 = arith.mulf %19, %22 : vector<8x64xf32>
    %25 = arith.addf %23, %24 : vector<8x64xf32>
    %26 = math.tanh %25 : vector<8x64xf32>
    %27 = arith.mulf %21, %26 : vector<8x64xf32>
    %c8 = arith.constant 8 : index
    %c0_16 = arith.constant 0 : index
    %28 = vector.load %arg7[%c8, %c0_16] : memref<64x256xf32, #tpu.memory_space<vmem>>, vector<8x256xf32>
    %c0_17 = arith.constant 0 : index
    %c0_18 = arith.constant 0 : index
    %29 = vector.load %arg2[%c0_17, %c0_18] : memref<64x256xf32, #tpu.memory_space<vmem>>, vector<64x256xf32>
    %cst_19 = arith.constant dense<0.000000e+00> : vector<8x256xf32>
    %30 = tpu.matmul %27, %29, %cst_19 {dimension_numbers = #tpu.dot_dimension_numbers<[1], [0], [0], [1], [0, 0, 1, 1], [], []>} : vector<8x64xf32>, vector<64x256xf32>, vector<8x256xf32> -> vector<8x256xf32>
    %31 = arith.addf %28, %30 : vector<8x256xf32>
    %32 = math.tanh %31 : vector<8x256xf32>
    %33 = vector.extract_strided_slice %32 {offsets = [0, 0], sizes = [8, 192], strides = [1, 1]} : vector<8x256xf32> to vector<8x192xf32>
    %cst_20 = arith.constant 5.000000e-01 : f32
    %34 = vector.broadcast %cst_20 : f32 to vector<8x192xf32>
    %35 = arith.mulf %34, %33 : vector<8x192xf32>
    %cst_21 = arith.constant 5.000000e-01 : f32
    %36 = vector.broadcast %cst_21 : f32 to vector<8x192xf32>
    %37 = arith.addf %35, %36 : vector<8x192xf32>
    %38 = vector.extract_strided_slice %37 {offsets = [0, 0], sizes = [8, 64], strides = [1, 1]} : vector<8x192xf32> to vector<8x64xf32>
    %39 = vector.extract_strided_slice %37 {offsets = [0, 64], sizes = [8, 64], strides = [1, 1]} : vector<8x192xf32> to vector<8x64xf32>
    %40 = vector.extract_strided_slice %37 {offsets = [0, 128], sizes = [8, 64], strides = [1, 1]} : vector<8x192xf32> to vector<8x64xf32>
    %41 = vector.extract_strided_slice %32 {offsets = [0, 192], sizes = [8, 64], strides = [1, 1]} : vector<8x256xf32> to vector<8x64xf32>
    %42 = arith.mulf %39, %25 : vector<8x64xf32>
    %43 = arith.mulf %38, %41 : vector<8x64xf32>
    %44 = arith.addf %42, %43 : vector<8x64xf32>
    %45 = math.tanh %44 : vector<8x64xf32>
    %46 = arith.mulf %40, %45 : vector<8x64xf32>
    %c16 = arith.constant 16 : index
    %c0_22 = arith.constant 0 : index
    %47 = vector.load %arg7[%c16, %c0_22] : memref<64x256xf32, #tpu.memory_space<vmem>>, vector<8x256xf32>
    %c0_23 = arith.constant 0 : index
    %c0_24 = arith.constant 0 : index
    %48 = vector.load %arg2[%c0_23, %c0_24] : memref<64x256xf32, #tpu.memory_space<vmem>>, vector<64x256xf32>
    %cst_25 = arith.constant dense<0.000000e+00> : vector<8x256xf32>
    %49 = tpu.matmul %46, %48, %cst_25 {dimension_numbers = #tpu.dot_dimension_numbers<[1], [0], [0], [1], [0, 0, 1, 1], [], []>} : vector<8x64xf32>, vector<64x256xf32>, vector<8x256xf32> -> vector<8x256xf32>
    %50 = arith.addf %47, %49 : vector<8x256xf32>
    %51 = math.tanh %50 : vector<8x256xf32>
    %52 = vector.extract_strided_slice %51 {offsets = [0, 0], sizes = [8, 192], strides = [1, 1]} : vector<8x256xf32> to vector<8x192xf32>
    %cst_26 = arith.constant 5.000000e-01 : f32
    %53 = vector.broadcast %cst_26 : f32 to vector<8x192xf32>
    %54 = arith.mulf %53, %52 : vector<8x192xf32>
    %cst_27 = arith.constant 5.000000e-01 : f32
    %55 = vector.broadcast %cst_27 : f32 to vector<8x192xf32>
    %56 = arith.addf %54, %55 : vector<8x192xf32>
    %57 = vector.extract_strided_slice %56 {offsets = [0, 0], sizes = [8, 64], strides = [1, 1]} : vector<8x192xf32> to vector<8x64xf32>
    %58 = vector.extract_strided_slice %56 {offsets = [0, 64], sizes = [8, 64], strides = [1, 1]} : vector<8x192xf32> to vector<8x64xf32>
    %59 = vector.extract_strided_slice %56 {offsets = [0, 128], sizes = [8, 64], strides = [1, 1]} : vector<8x192xf32> to vector<8x64xf32>
    %60 = vector.extract_strided_slice %51 {offsets = [0, 192], sizes = [8, 64], strides = [1, 1]} : vector<8x256xf32> to vector<8x64xf32>
    %61 = arith.mulf %58, %44 : vector<8x64xf32>
    %62 = arith.mulf %57, %60 : vector<8x64xf32>
    %63 = arith.addf %61, %62 : vector<8x64xf32>
    %64 = math.tanh %63 : vector<8x64xf32>
    %65 = arith.mulf %59, %64 : vector<8x64xf32>
    %c24 = arith.constant 24 : index
    %c0_28 = arith.constant 0 : index
    %66 = vector.load %arg7[%c24, %c0_28] : memref<64x256xf32, #tpu.memory_space<vmem>>, vector<8x256xf32>
    %c0_29 = arith.constant 0 : index
    %c0_30 = arith.constant 0 : index
    %67 = vector.load %arg2[%c0_29, %c0_30] : memref<64x256xf32, #tpu.memory_space<vmem>>, vector<64x256xf32>
    %cst_31 = arith.constant dense<0.000000e+00> : vector<8x256xf32>
    %68 = tpu.matmul %65, %67, %cst_31 {dimension_numbers = #tpu.dot_dimension_numbers<[1], [0], [0], [1], [0, 0, 1, 1], [], []>} : vector<8x64xf32>, vector<64x256xf32>, vector<8x256xf32> -> vector<8x256xf32>
    %69 = arith.addf %66, %68 : vector<8x256xf32>
    %70 = math.tanh %69 : vector<8x256xf32>
    %71 = vector.extract_strided_slice %70 {offsets = [0, 0], sizes = [8, 192], strides = [1, 1]} : vector<8x256xf32> to vector<8x192xf32>
    %cst_32 = arith.constant 5.000000e-01 : f32
    %72 = vector.broadcast %cst_32 : f32 to vector<8x192xf32>
    %73 = arith.mulf %72, %71 : vector<8x192xf32>
    %cst_33 = arith.constant 5.000000e-01 : f32
    %74 = vector.broadcast %cst_33 : f32 to vector<8x192xf32>
    %75 = arith.addf %73, %74 : vector<8x192xf32>
    %76 = vector.extract_strided_slice %75 {offsets = [0, 0], sizes = [8, 64], strides = [1, 1]} : vector<8x192xf32> to vector<8x64xf32>
    %77 = vector.extract_strided_slice %75 {offsets = [0, 64], sizes = [8, 64], strides = [1, 1]} : vector<8x192xf32> to vector<8x64xf32>
    %78 = vector.extract_strided_slice %75 {offsets = [0, 128], sizes = [8, 64], strides = [1, 1]} : vector<8x192xf32> to vector<8x64xf32>
    %79 = vector.extract_strided_slice %70 {offsets = [0, 192], sizes = [8, 64], strides = [1, 1]} : vector<8x256xf32> to vector<8x64xf32>
    %80 = arith.mulf %77, %63 : vector<8x64xf32>
    %81 = arith.mulf %76, %79 : vector<8x64xf32>
    %82 = arith.addf %80, %81 : vector<8x64xf32>
    %83 = math.tanh %82 : vector<8x64xf32>
    %84 = arith.mulf %78, %83 : vector<8x64xf32>
    %c32 = arith.constant 32 : index
    %c0_34 = arith.constant 0 : index
    %85 = vector.load %arg7[%c32, %c0_34] : memref<64x256xf32, #tpu.memory_space<vmem>>, vector<8x256xf32>
    %c0_35 = arith.constant 0 : index
    %c0_36 = arith.constant 0 : index
    %86 = vector.load %arg2[%c0_35, %c0_36] : memref<64x256xf32, #tpu.memory_space<vmem>>, vector<64x256xf32>
    %cst_37 = arith.constant dense<0.000000e+00> : vector<8x256xf32>
    %87 = tpu.matmul %84, %86, %cst_37 {dimension_numbers = #tpu.dot_dimension_numbers<[1], [0], [0], [1], [0, 0, 1, 1], [], []>} : vector<8x64xf32>, vector<64x256xf32>, vector<8x256xf32> -> vector<8x256xf32>
    %88 = arith.addf %85, %87 : vector<8x256xf32>
    %89 = math.tanh %88 : vector<8x256xf32>
    %90 = vector.extract_strided_slice %89 {offsets = [0, 0], sizes = [8, 192], strides = [1, 1]} : vector<8x256xf32> to vector<8x192xf32>
    %cst_38 = arith.constant 5.000000e-01 : f32
    %91 = vector.broadcast %cst_38 : f32 to vector<8x192xf32>
    %92 = arith.mulf %91, %90 : vector<8x192xf32>
    %cst_39 = arith.constant 5.000000e-01 : f32
    %93 = vector.broadcast %cst_39 : f32 to vector<8x192xf32>
    %94 = arith.addf %92, %93 : vector<8x192xf32>
    %95 = vector.extract_strided_slice %94 {offsets = [0, 0], sizes = [8, 64], strides = [1, 1]} : vector<8x192xf32> to vector<8x64xf32>
    %96 = vector.extract_strided_slice %94 {offsets = [0, 64], sizes = [8, 64], strides = [1, 1]} : vector<8x192xf32> to vector<8x64xf32>
    %97 = vector.extract_strided_slice %94 {offsets = [0, 128], sizes = [8, 64], strides = [1, 1]} : vector<8x192xf32> to vector<8x64xf32>
    %98 = vector.extract_strided_slice %89 {offsets = [0, 192], sizes = [8, 64], strides = [1, 1]} : vector<8x256xf32> to vector<8x64xf32>
    %99 = arith.mulf %96, %82 : vector<8x64xf32>
    %100 = arith.mulf %95, %98 : vector<8x64xf32>
    %101 = arith.addf %99, %100 : vector<8x64xf32>
    %102 = math.tanh %101 : vector<8x64xf32>
    %103 = arith.mulf %97, %102 : vector<8x64xf32>
    %c40 = arith.constant 40 : index
    %c0_40 = arith.constant 0 : index
    %104 = vector.load %arg7[%c40, %c0_40] : memref<64x256xf32, #tpu.memory_space<vmem>>, vector<8x256xf32>
    %c0_41 = arith.constant 0 : index
    %c0_42 = arith.constant 0 : index
    %105 = vector.load %arg2[%c0_41, %c0_42] : memref<64x256xf32, #tpu.memory_space<vmem>>, vector<64x256xf32>
    %cst_43 = arith.constant dense<0.000000e+00> : vector<8x256xf32>
    %106 = tpu.matmul %103, %105, %cst_43 {dimension_numbers = #tpu.dot_dimension_numbers<[1], [0], [0], [1], [0, 0, 1, 1], [], []>} : vector<8x64xf32>, vector<64x256xf32>, vector<8x256xf32> -> vector<8x256xf32>
    %107 = arith.addf %104, %106 : vector<8x256xf32>
    %108 = math.tanh %107 : vector<8x256xf32>
    %109 = vector.extract_strided_slice %108 {offsets = [0, 0], sizes = [8, 192], strides = [1, 1]} : vector<8x256xf32> to vector<8x192xf32>
    %cst_44 = arith.constant 5.000000e-01 : f32
    %110 = vector.broadcast %cst_44 : f32 to vector<8x192xf32>
    %111 = arith.mulf %110, %109 : vector<8x192xf32>
    %cst_45 = arith.constant 5.000000e-01 : f32
    %112 = vector.broadcast %cst_45 : f32 to vector<8x192xf32>
    %113 = arith.addf %111, %112 : vector<8x192xf32>
    %114 = vector.extract_strided_slice %113 {offsets = [0, 0], sizes = [8, 64], strides = [1, 1]} : vector<8x192xf32> to vector<8x64xf32>
    %115 = vector.extract_strided_slice %113 {offsets = [0, 64], sizes = [8, 64], strides = [1, 1]} : vector<8x192xf32> to vector<8x64xf32>
    %116 = vector.extract_strided_slice %113 {offsets = [0, 128], sizes = [8, 64], strides = [1, 1]} : vector<8x192xf32> to vector<8x64xf32>
    %117 = vector.extract_strided_slice %108 {offsets = [0, 192], sizes = [8, 64], strides = [1, 1]} : vector<8x256xf32> to vector<8x64xf32>
    %118 = arith.mulf %115, %101 : vector<8x64xf32>
    %119 = arith.mulf %114, %117 : vector<8x64xf32>
    %120 = arith.addf %118, %119 : vector<8x64xf32>
    %121 = math.tanh %120 : vector<8x64xf32>
    %122 = arith.mulf %116, %121 : vector<8x64xf32>
    %c48 = arith.constant 48 : index
    %c0_46 = arith.constant 0 : index
    %123 = vector.load %arg7[%c48, %c0_46] : memref<64x256xf32, #tpu.memory_space<vmem>>, vector<8x256xf32>
    %c0_47 = arith.constant 0 : index
    %c0_48 = arith.constant 0 : index
    %124 = vector.load %arg2[%c0_47, %c0_48] : memref<64x256xf32, #tpu.memory_space<vmem>>, vector<64x256xf32>
    %cst_49 = arith.constant dense<0.000000e+00> : vector<8x256xf32>
    %125 = tpu.matmul %122, %124, %cst_49 {dimension_numbers = #tpu.dot_dimension_numbers<[1], [0], [0], [1], [0, 0, 1, 1], [], []>} : vector<8x64xf32>, vector<64x256xf32>, vector<8x256xf32> -> vector<8x256xf32>
    %126 = arith.addf %123, %125 : vector<8x256xf32>
    %127 = math.tanh %126 : vector<8x256xf32>
    %128 = vector.extract_strided_slice %127 {offsets = [0, 0], sizes = [8, 192], strides = [1, 1]} : vector<8x256xf32> to vector<8x192xf32>
    %cst_50 = arith.constant 5.000000e-01 : f32
    %129 = vector.broadcast %cst_50 : f32 to vector<8x192xf32>
    %130 = arith.mulf %129, %128 : vector<8x192xf32>
    %cst_51 = arith.constant 5.000000e-01 : f32
    %131 = vector.broadcast %cst_51 : f32 to vector<8x192xf32>
    %132 = arith.addf %130, %131 : vector<8x192xf32>
    %133 = vector.extract_strided_slice %132 {offsets = [0, 0], sizes = [8, 64], strides = [1, 1]} : vector<8x192xf32> to vector<8x64xf32>
    %134 = vector.extract_strided_slice %132 {offsets = [0, 64], sizes = [8, 64], strides = [1, 1]} : vector<8x192xf32> to vector<8x64xf32>
    %135 = vector.extract_strided_slice %132 {offsets = [0, 128], sizes = [8, 64], strides = [1, 1]} : vector<8x192xf32> to vector<8x64xf32>
    %136 = vector.extract_strided_slice %127 {offsets = [0, 192], sizes = [8, 64], strides = [1, 1]} : vector<8x256xf32> to vector<8x64xf32>
    %137 = arith.mulf %134, %120 : vector<8x64xf32>
    %138 = arith.mulf %133, %136 : vector<8x64xf32>
    %139 = arith.addf %137, %138 : vector<8x64xf32>
    %140 = math.tanh %139 : vector<8x64xf32>
    %141 = arith.mulf %135, %140 : vector<8x64xf32>
    %c56 = arith.constant 56 : index
    %c0_52 = arith.constant 0 : index
    %142 = vector.load %arg7[%c56, %c0_52] : memref<64x256xf32, #tpu.memory_space<vmem>>, vector<8x256xf32>
    %c0_53 = arith.constant 0 : index
    %c0_54 = arith.constant 0 : index
    %143 = vector.load %arg2[%c0_53, %c0_54] : memref<64x256xf32, #tpu.memory_space<vmem>>, vector<64x256xf32>
    %cst_55 = arith.constant dense<0.000000e+00> : vector<8x256xf32>
    %144 = tpu.matmul %141, %143, %cst_55 {dimension_numbers = #tpu.dot_dimension_numbers<[1], [0], [0], [1], [0, 0, 1, 1], [], []>} : vector<8x64xf32>, vector<64x256xf32>, vector<8x256xf32> -> vector<8x256xf32>
    %145 = arith.addf %142, %144 : vector<8x256xf32>
    %146 = math.tanh %145 : vector<8x256xf32>
    %147 = vector.extract_strided_slice %146 {offsets = [0, 0], sizes = [8, 192], strides = [1, 1]} : vector<8x256xf32> to vector<8x192xf32>
    %cst_56 = arith.constant 5.000000e-01 : f32
    %148 = vector.broadcast %cst_56 : f32 to vector<8x192xf32>
    %149 = arith.mulf %148, %147 : vector<8x192xf32>
    %cst_57 = arith.constant 5.000000e-01 : f32
    %150 = vector.broadcast %cst_57 : f32 to vector<8x192xf32>
    %151 = arith.addf %149, %150 : vector<8x192xf32>
    %152 = vector.extract_strided_slice %151 {offsets = [0, 0], sizes = [8, 64], strides = [1, 1]} : vector<8x192xf32> to vector<8x64xf32>
    %153 = vector.extract_strided_slice %151 {offsets = [0, 64], sizes = [8, 64], strides = [1, 1]} : vector<8x192xf32> to vector<8x64xf32>
    %154 = vector.extract_strided_slice %151 {offsets = [0, 128], sizes = [8, 64], strides = [1, 1]} : vector<8x192xf32> to vector<8x64xf32>
    %155 = vector.extract_strided_slice %146 {offsets = [0, 192], sizes = [8, 64], strides = [1, 1]} : vector<8x256xf32> to vector<8x64xf32>
    %156 = arith.mulf %153, %139 : vector<8x64xf32>
    %157 = arith.mulf %152, %155 : vector<8x64xf32>
    %158 = arith.addf %156, %157 : vector<8x64xf32>
    %159 = math.tanh %158 : vector<8x64xf32>
    %160 = arith.mulf %154, %159 : vector<8x64xf32>
    %c0_58 = arith.constant 0 : index
    %c0_59 = arith.constant 0 : index
    %161 = vector.load %arg4[%c0_58, %c0_59] : memref<64x128xf32, #tpu.memory_space<vmem>>, vector<64x128xf32>
    %cst_60 = arith.constant dense<0.000000e+00> : vector<8x128xf32>
    %162 = tpu.matmul %160, %161, %cst_60 {dimension_numbers = #tpu.dot_dimension_numbers<[1], [0], [0], [1], [0, 0, 1, 1], [], []>} : vector<8x64xf32>, vector<64x128xf32>, vector<8x128xf32> -> vector<8x128xf32>
    %c0_61 = arith.constant 0 : index
    %c0_62 = arith.constant 0 : index
    %163 = vector.load %arg5[%c0_61, %c0_62] : memref<1x128xf32, #tpu.memory_space<vmem>>, vector<1x128xf32>
    %164 = vector.broadcast %163 : vector<1x128xf32> to vector<8x128xf32>
    %165 = arith.addf %162, %164 : vector<8x128xf32>
    %c0_63 = arith.constant 0 : index
    %c0_64 = arith.constant 0 : index
    %166 = vector.load %arg6[%c0_63, %c0_64] : memref<8x128xf32, #tpu.memory_space<vmem>>, vector<8x128xf32>
    tpu.vector_store %arg6[%c0_63, %c0_64], %165 {strides = array<i32>} : memref<8x128xf32, #tpu.memory_space<vmem>>, vector<8x128xf32>,
    return
  }
}

</mosaic_0001>

<llo_original>
// kernel: time_series_model.1
$region0: #{time_series_model.1}
  #allocation0 [shape = 'u32[]', space=smem, size = 0x4, offset = 0x4, fixed_abs, tag = 'smem constant byte address 0x4 - core index']
  #allocation1 [shape = 'u32[72,128]{1,0:T(1,128)}', space=vmem, size = 0x9000, scoped, tag = 'internal scratch']
  #allocation2 [shape = 'f32[64,256]{1,0:T(8,128)}', space=vmem, size = 0x10000, scoped, tag = 'scratch operand']
  %s0 = inlined_call_operand.vmem [shape: f32[64,10], index: 0, kind: input, shape index: {}]
  %s1 = inlined_call_operand.vmem [shape: f32[10,256], index: 1, kind: input, shape index: {}]
  %s2 = inlined_call_operand.hbm [shape: f32[64,256], index: 2, kind: input, shape index: {}]
  %s3 = inlined_call_operand.vmem [shape: f32[1,256], index: 3, kind: input, shape index: {}]
  %s4 = inlined_call_operand.vmem [shape: f32[64,128], index: 4, kind: input, shape index: {}]
  %s5 = inlined_call_operand.vmem [shape: f32[1,128], index: 5, kind: input, shape index: {}]
  %s6 = inlined_call_operand.vmem [shape: f32[8,128], index: 6, kind: output, shape index: {}]
  %s7 = sld [smem:[#allocation0]]
  $region38: #{time_series_model.1} parent=0
    _
  %s9 = ssub.s32 1, %s7
  %s10 = scalar_select 0, %s9, %s7
  $region1: #{time_series_model.1} parent=0
    #allocation3 [shape = 'u8[65536]{0}', space=vmem, size = 0x10000, scoped, tag = 'input window, operand 2, single buffered']
    #allocation4 [shape = 's32[1]{0}', space=sflag, size = 0x4, scoped, tag = 'scoped memory for time_series_model.1']
    %11 = vsyncpa [#allocation4], 0
    // Predicated region
    $region2: #{time_series_model.1} parent=1 // pred_check
      _
    $region3: #{time_series_model.1} parent=1 // pred_check_branch
      %13 = sbr.rel (0) target = $region5
    $region4: #{time_series_model.1} parent=1 // pred_region
      _
    $region5: #{time_series_model.1} parent=1 // pred_fallthru
      _
    // Predicated region
    $region6: #{time_series_model.1} parent=1 // pred_check
      _
    $region7: #{time_series_model.1} parent=1 // pred_check_branch
      %15 = sbr.rel (0) target = $region9
    $region8: #{time_series_model.1} parent=1 // pred_region
      _
    $region9: #{time_series_model.1} parent=1 // pred_fallthru
      _
    // Predicated region
    $region10: #{time_series_model.1} parent=1 // pred_check
      _
    $region11: #{time_series_model.1} parent=1 // pred_check_branch
      %17 = sbr.rel (0) target = $region13
    $region12: #{time_series_model.1} parent=1 // pred_region
      %19 = vsyncadd [#allocation4], 0
      %s20 = sshll.u32 %s2, 4
      %s21 = int_to_ptr.hbm [resolvable:$true] %s20
      %s22 = sshll.u32 [#allocation3], 4
      %s23 = int_to_ptr.vmem [resolvable:$true] %s22
      %28 = dma.hbm_to_vmem [thread:$0]  %s21, 2048, %s23, [#allocation4], 256, 256, 16
    $region13: #{time_series_model.1} parent=1 // pred_fallthru
      _
    // Predicated region
    $region14: #{time_series_model.1} parent=1 // pred_check
      _
    $region15: #{time_series_model.1} parent=1 // pred_check_branch
      %30 = sbr.rel (0) target = $region17
    $region16: #{time_series_model.1} parent=1 // pred_region
      _
    $region17: #{time_series_model.1} parent=1 // pred_fallthru
      _
    // Predicated region
    $region18: #{time_series_model.1} parent=1 // pred_check
      _
    $region19: #{time_series_model.1} parent=1 // pred_check_branch
      %32 = sbr.rel (0) target = $region21
    $region20: #{time_series_model.1} parent=1 // pred_region
      _
    $region21: #{time_series_model.1} parent=1 // pred_fallthru
      _
    // Predicated region
    $region22: #{time_series_model.1} parent=1 // pred_check
      _
    $region23: #{time_series_model.1} parent=1 // pred_check_branch
      %34 = sbr.rel (0) target = $region25
    $region24: #{time_series_model.1} parent=1 // pred_region
      _
    $region25: #{time_series_model.1} parent=1 // pred_fallthru
      _
    // Predicated region
    $region26: #{time_series_model.1} parent=1 // pred_check
      _
    $region27: #{time_series_model.1} parent=1 // pred_check_branch
      %36 = sbr.rel (0) target = $region29
    $region28: #{time_series_model.1} parent=1 // pred_region
      %38 = dma.done [#allocation4], 2048
    $region29: #{time_series_model.1} parent=1 // pred_fallthru
      _
    %v39 = vld [vmem:[%s0] sm:$0xff]
    %v40 = vld [vmem:[%s0 + $0x8] sm:$0xff]
    %v41 = vld [vmem:[%s0 + $0x10] sm:$0xff]
    %v42 = vld [vmem:[%s0 + $0x18] sm:$0xff]
    %v43 = vld [vmem:[%s0 + $0x20] sm:$0xff]
    %v44 = vld [vmem:[%s0 + $0x28] sm:$0xff]
    %v45 = vld [vmem:[%s0 + $0x30] sm:$0xff]
    %v46 = vld [vmem:[%s0 + $0x38] sm:$0xff]
    %v47 = vld [vmem:[%s1] sm:$0xff]
    %v48 = vld [vmem:[%s1 + $0x8] sm:$0xff]
    %v49 = vld [vmem:[%s1 + $0x10] sm:$0x3]
    %v50 = vld [vmem:[%s1 + $0x18] sm:$0x3]
    %v51 = vld [vmem:[%s3] sm:$0x3]
    %v53 = vperm.slane %v51, 0
    %v54 = vperm.slane %v51, 1
    %vm57 = vcmask 80896
    %v59 = vsel %vm57, %v39, 0
    %v62 = vsel %vm57, %v40, 0
    %v65 = vsel %vm57, %v41, 0
    %v68 = vsel %vm57, %v42, 0
    %v71 = vsel %vm57, %v43, 0
    %v74 = vsel %vm57, %v44, 0
    %v77 = vsel %vm57, %v45, 0
    %v80 = vsel %vm57, %v46, 0
    %vm82 = vcmask 1041408
    %v84 = vsel %vm82, %v49, 0
    %v87 = vsel %vm82, %v50, 0
    %89 = vmatpush.msra.mxu0 0.0
    %90 = vmatpush.msra.mxu0 0.0
    %91 = vmatpush.msra.mxu0 0.0
    %92 = vmatpush.msra.mxu0 0.0
    %93 = vmatpush.msra.mxu0 0.0
    %94 = vmatpush.msra.mxu0 0.0
    %95 = vmatpush.msra.mxu0 0.0
    %96 = vmatpush.msra.mxu0 0.0
    %97 = vmatpush.msra.mxu0 0.0
    %98 = vmatpush.msra.mxu0 0.0
    %99 = vmatpush.msra.mxu0 0.0
    %100 = vmatpush.msra.mxu0 0.0
    %101 = vmatpush.msra.mxu0 0.0
    %102 = vmatpush.msra.mxu0 0.0
    %103 = vmatpush.msra.mxu0 %v84
    %104 = vmatpush.msra.mxu0 %v47
    %105 = vmatmul.f32.gmra.mxu0 %v59
    %v106 = vpop.f32.mrf.mxu0
    %v107 = vadd.f32 %v53, %v106
    %108 = vmatmul.f32.gmra.mxu0 %v62
    %v109 = vpop.f32.mrf.mxu0
    %v110 = vadd.f32 %v53, %v109
    %111 = vmatmul.f32.gmra.mxu0 %v65
    %v112 = vpop.f32.mrf.mxu0
    %v113 = vadd.f32 %v53, %v112
    %114 = vmatmul.f32.gmra.mxu0 %v68
    %v115 = vpop.f32.mrf.mxu0
    %v116 = vadd.f32 %v53, %v115
    %117 = vmatmul.f32.gmra.mxu0 %v71
    %v118 = vpop.f32.mrf.mxu0
    %v119 = vadd.f32 %v53, %v118
    %120 = vmatmul.f32.gmra.mxu0 %v74
    %v121 = vpop.f32.mrf.mxu0
    %v122 = vadd.f32 %v53, %v121
    %123 = vmatmul.f32.gmra.mxu0 %v77
    %v124 = vpop.f32.mrf.mxu0
    %v125 = vadd.f32 %v53, %v124
    %126 = vmatmul.f32.gmra.mxu0 %v80
    %v127 = vpop.f32.mrf.mxu0
    %v128 = vadd.f32 %v53, %v127
    %129 = vdwg.mxu0
    %130 = vmatpush.msra.mxu0 0.0
    %131 = vmatpush.msra.mxu0 0.0
    %132 = vmatpush.msra.mxu0 0.0
    %133 = vmatpush.msra.mxu0 0.0
    %134 = vmatpush.msra.mxu0 0.0
    %135 = vmatpush.msra.mxu0 0.0
    %136 = vmatpush.msra.mxu0 0.0
    %137 = vmatpush.msra.mxu0 0.0
    %138 = vmatpush.msra.mxu0 0.0
    %139 = vmatpush.msra.mxu0 0.0
    %140 = vmatpush.msra.mxu0 0.0
    %141 = vmatpush.msra.mxu0 0.0
    %142 = vmatpush.msra.mxu0 0.0
    %143 = vmatpush.msra.mxu0 0.0
    %144 = vmatpush.msra.mxu0 %v87
    %145 = vmatpush.msra.mxu0 %v48
    %146 = vmatmul.f32.gmra.mxu0 %v59
    %v147 = vpop.f32.mrf.mxu0
    %v148 = vadd.f32 %v54, %v147
    %149 = vmatmul.f32.gmra.mxu0 %v62
    %v150 = vpop.f32.mrf.mxu0
    %v151 = vadd.f32 %v54, %v150
    %152 = vmatmul.f32.gmra.mxu0 %v65
    %v153 = vpop.f32.mrf.mxu0
    %v154 = vadd.f32 %v54, %v153
    %155 = vmatmul.f32.gmra.mxu0 %v68
    %v156 = vpop.f32.mrf.mxu0
    %v157 = vadd.f32 %v54, %v156
    %158 = vmatmul.f32.gmra.mxu0 %v71
    %v159 = vpop.f32.mrf.mxu0
    %v160 = vadd.f32 %v54, %v159
    %161 = vmatmul.f32.gmra.mxu0 %v74
    %v162 = vpop.f32.mrf.mxu0
    %v163 = vadd.f32 %v54, %v162
    %164 = vmatmul.f32.gmra.mxu0 %v77
    %v165 = vpop.f32.mrf.mxu0
    %v166 = vadd.f32 %v54, %v165
    %167 = vmatmul.f32.gmra.mxu0 %v80
    %v168 = vpop.f32.mrf.mxu0
    %v169 = vadd.f32 %v54, %v168
    %170 = vdwg.mxu0
    %171 = vst [vmem:[#allocation2] sm:$0xff] %v107
    %172 = vst [vmem:[#allocation2 + $0x8] sm:$0xff] %v148
    %173 = vst [vmem:[#allocation2 + $0x10] sm:$0xff] %v110
    %174 = vst [vmem:[#allocation2 + $0x18] sm:$0xff] %v151
    %175 = vst [vmem:[#allocation2 + $0x20] sm:$0xff] %v113
    %176 = vst [vmem:[#allocation2 + $0x28] sm:$0xff] %v154
    %177 = vst [vmem:[#allocation2 + $0x30] sm:$0xff] %v116
    %178 = vst [vmem:[#allocation2 + $0x38] sm:$0xff] %v157
    %179 = vst [vmem:[#allocation2 + $0x40] sm:$0xff] %v119
    %180 = vst [vmem:[#allocation2 + $0x48] sm:$0xff] %v160
    %181 = vst [vmem:[#allocation2 + $0x50] sm:$0xff] %v122
    %182 = vst [vmem:[#allocation2 + $0x58] sm:$0xff] %v163
    %183 = vst [vmem:[#allocation2 + $0x60] sm:$0xff] %v125
    %184 = vst [vmem:[#allocation2 + $0x68] sm:$0xff] %v166
    %185 = vst [vmem:[#allocation2 + $0x70] sm:$0xff] %v128
    %186 = vst [vmem:[#allocation2 + $0x78] sm:$0xff] %v169
    %v187 = vld [vmem:[#allocation2] sm:$0xff]
    %v188 = vld [vmem:[#allocation2 + $0x8] sm:$0xff]
    %v189 = vld [vmem:[#allocation3] sm:$0xff]
    %v190 = vld [vmem:[#allocation3 + $0x8] sm:$0xff]
    %v191 = vld [vmem:[#allocation3 + $0x10] sm:$0xff]
    %v192 = vld [vmem:[#allocation3 + $0x18] sm:$0xff]
    %v193 = vld [vmem:[#allocation3 + $0x20] sm:$0xff]
    %v194 = vld [vmem:[#allocation3 + $0x28] sm:$0xff]
    %v195 = vld [vmem:[#allocation3 + $0x30] sm:$0xff]
    %v196 = vld [vmem:[#allocation3 + $0x38] sm:$0xff]
    %v197 = vld [vmem:[#allocation3 + $0x40] sm:$0xff]
    %v198 = vld [vmem:[#allocation3 + $0x48] sm:$0xff]
    %v199 = vld [vmem:[#allocation3 + $0x50] sm:$0xff]
    %v200 = vld [vmem:[#allocation3 + $0x58] sm:$0xff]
    %v201 = vld [vmem:[#allocation3 + $0x60] sm:$0xff]
    %v202 = vld [vmem:[#allocation3 + $0x68] sm:$0xff]
    %v203 = vld [vmem:[#allocation3 + $0x70] sm:$0xff]
    %v204 = vld [vmem:[#allocation3 + $0x78] sm:$0xff]
    %vm205 = vcmask 523264
    %v207 = vsel %vm205, 0.0, 0
    %209 = vmatpush.msra.mxu0 0.0
    %210 = vmatpush.msra.mxu0 0.0
    %211 = vmatpush.msra.mxu0 0.0
    %212 = vmatpush.msra.mxu0 0.0
    %213 = vmatpush.msra.mxu0 0.0
    %214 = vmatpush.msra.mxu0 0.0
    %215 = vmatpush.msra.mxu0 0.0
    %216 = vmatpush.msra.mxu0 0.0
    %217 = vmatpush.msra.mxu0 %v203
    %218 = vmatpush.msra.mxu0 %v201
    %219 = vmatpush.msra.mxu0 %v199
    %220 = vmatpush.msra.mxu0 %v197
    %221 = vmatpush.msra.mxu0 %v195
    %222 = vmatpush.msra.mxu0 %v193
    %223 = vmatpush.msra.mxu0 %v191
    %224 = vmatpush.msra.mxu0 %v189
    %225 = vmatmul.f32.gmra.mxu0 %v207
    %v226 = vpop.f32.mrf.mxu0
    %v227 = vadd.f32 0.0, %v226
    %228 = vdwg.mxu0
    %229 = vmatpush.msra.mxu0 0.0
    %230 = vmatpush.msra.mxu0 0.0
    %231 = vmatpush.msra.mxu0 0.0
    %232 = vmatpush.msra.mxu0 0.0
    %233 = vmatpush.msra.mxu0 0.0
    %234 = vmatpush.msra.mxu0 0.0
    %235 = vmatpush.msra.mxu0 0.0
    %236 = vmatpush.msra.mxu0 0.0
    %237 = vmatpush.msra.mxu0 %v204
    %238 = vmatpush.msra.mxu0 %v202
    %239 = vmatpush.msra.mxu0 %v200
    %240 = vmatpush.msra.mxu0 %v198
    %241 = vmatpush.msra.mxu0 %v196
    %242 = vmatpush.msra.mxu0 %v194
    %243 = vmatpush.msra.mxu0 %v192
    %244 = vmatpush.msra.mxu0 %v190
    %245 = vmatmul.f32.gmra.mxu0 %v207
    %v246 = vpop.f32.mrf.mxu0
    %v247 = vadd.f32 0.0, %v246
    %248 = vdwg.mxu0
    %v249 = vadd.f32 %v187, %v227
    %v250 = vadd.f32 %v188, %v247
    %v251 = vtanh.pop %v249
    %v252 = vtanh.pop %v250
    %v253 = vmul.f32 %v251, 0.5
    %v254 = vmul.f32 %v252, 0.5
    %v255 = vadd.f32 %v253, 0.5
    %v256 = vadd.f32 %v254, 0.5
    %v257 = vmul.f32 %v255, 0.0
    %259 = vrot.lane.b32.xlu0 %v252, 64
    %v260 = vpop.permute.xlu0 %259
    %v262 = vmul.f32 %v255, %v260
    %264 = vrot.lane.b32.xlu0 %v262, 64
    %v265 = vpop.permute.xlu0 %264
    %v267 = vadd.f32 %v257, %v265
    %v268 = vtanh.pop %v267
    %270 = vrot.lane.b32.xlu0 %v268, 64
    %v271 = vpop.permute.xlu0 %270
    %v273 = vmul.f32 %v256, %v271
    %v274 = vld [vmem:[#allocation2 + $0x10] sm:$0xff]
    %v275 = vld [vmem:[#allocation2 + $0x18] sm:$0xff]
    %v277 = vsel %vm205, %v273, 0
    %279 = vmatpush.msra.mxu0 0.0
    %280 = vmatpush.msra.mxu0 0.0
    %281 = vmatpush.msra.mxu0 0.0
    %282 = vmatpush.msra.mxu0 0.0
    %283 = vmatpush.msra.mxu0 0.0
    %284 = vmatpush.msra.mxu0 0.0
    %285 = vmatpush.msra.mxu0 0.0
    %286 = vmatpush.msra.mxu0 0.0
    %287 = vmatpush.msra.mxu0 %v203
    %288 = vmatpush.msra.mxu0 %v201
    %289 = vmatpush.msra.mxu0 %v199
    %290 = vmatpush.msra.mxu0 %v197
    %291 = vmatpush.msra.mxu0 %v195
    %292 = vmatpush.msra.mxu0 %v193
    %293 = vmatpush.msra.mxu0 %v191
    %294 = vmatpush.msra.mxu0 %v189
    %295 = vmatmul.f32.gmra.mxu0 %v277
    %v296 = vpop.f32.mrf.mxu0
    %v297 = vadd.f32 0.0, %v296
    %298 = vdwg.mxu0
    %299 = vmatpush.msra.mxu0 0.0
    %300 = vmatpush.msra.mxu0 0.0
    %301 = vmatpush.msra.mxu0 0.0
    %302 = vmatpush.msra.mxu0 0.0
    %303 = vmatpush.msra.mxu0 0.0
    %304 = vmatpush.msra.mxu0 0.0
    %305 = vmatpush.msra.mxu0 0.0
    %306 = vmatpush.msra.mxu0 0.0
    %307 = vmatpush.msra.mxu0 %v204
    %308 = vmatpush.msra.mxu0 %v202
    %309 = vmatpush.msra.mxu0 %v200
    %310 = vmatpush.msra.mxu0 %v198
    %311 = vmatpush.msra.mxu0 %v196
    %312 = vmatpush.msra.mxu0 %v194
    %313 = vmatpush.msra.mxu0 %v192
    %314 = vmatpush.msra.mxu0 %v190
    %315 = vmatmul.f32.gmra.mxu0 %v277
    %v316 = vpop.f32.mrf.mxu0
    %v317 = vadd.f32 0.0, %v316
    %318 = vdwg.mxu0
    %v319 = vadd.f32 %v274, %v297
    %v320 = vadd.f32 %v275, %v317
    %v321 = vtanh.pop %v319
    %v322 = vtanh.pop %v320
    %v323 = vmul.f32 %v321, 0.5
    %v324 = vmul.f32 %v322, 0.5
    %v325 = vadd.f32 %v323, 0.5
    %v326 = vadd.f32 %v324, 0.5
    %v327 = vmul.f32 %v325, %v267
    %329 = vrot.lane.b32.xlu0 %v322, 64
    %v330 = vpop.permute.xlu0 %329
    %v332 = vmul.f32 %v325, %v330
    %334 = vrot.lane.b32.xlu0 %v332, 64
    %v335 = vpop.permute.xlu0 %334
    %v337 = vadd.f32 %v327, %v335
    %v338 = vtanh.pop %v337
    %340 = vrot.lane.b32.xlu0 %v338, 64
    %v341 = vpop.permute.xlu0 %340
    %v343 = vmul.f32 %v326, %v341
    %v344 = vld [vmem:[#allocation2 + $0x20] sm:$0xff]
    %v345 = vld [vmem:[#allocation2 + $0x28] sm:$0xff]
    %v347 = vsel %vm205, %v343, 0
    %349 = vmatpush.msra.mxu0 0.0
    %350 = vmatpush.msra.mxu0 0.0
    %351 = vmatpush.msra.mxu0 0.0
    %352 = vmatpush.msra.mxu0 0.0
    %353 = vmatpush.msra.mxu0 0.0
    %354 = vmatpush.msra.mxu0 0.0
    %355 = vmatpush.msra.mxu0 0.0
    %356 = vmatpush.msra.mxu0 0.0
    %357 = vmatpush.msra.mxu0 %v203
    %358 = vmatpush.msra.mxu0 %v201
    %359 = vmatpush.msra.mxu0 %v199
    %360 = vmatpush.msra.mxu0 %v197
    %361 = vmatpush.msra.mxu0 %v195
    %362 = vmatpush.msra.mxu0 %v193
    %363 = vmatpush.msra.mxu0 %v191
    %364 = vmatpush.msra.mxu0 %v189
    %365 = vmatmul.f32.gmra.mxu0 %v347
    %v366 = vpop.f32.mrf.mxu0
    %v367 = vadd.f32 0.0, %v366
    %368 = vdwg.mxu0
    %369 = vmatpush.msra.mxu0 0.0
    %370 = vmatpush.msra.mxu0 0.0
    %371 = vmatpush.msra.mxu0 0.0
    %372 = vmatpush.msra.mxu0 0.0
    %373 = vmatpush.msra.mxu0 0.0
    %374 = vmatpush.msra.mxu0 0.0
    %375 = vmatpush.msra.mxu0 0.0
    %376 = vmatpush.msra.mxu0 0.0
    %377 = vmatpush.msra.mxu0 %v204
    %378 = vmatpush.msra.mxu0 %v202
    %379 = vmatpush.msra.mxu0 %v200
    %380 = vmatpush.msra.mxu0 %v198
    %381 = vmatpush.msra.mxu0 %v196
    %382 = vmatpush.msra.mxu0 %v194
    %383 = vmatpush.msra.mxu0 %v192
    %384 = vmatpush.msra.mxu0 %v190
    %385 = vmatmul.f32.gmra.mxu0 %v347
    %v386 = vpop.f32.mrf.mxu0
    %v387 = vadd.f32 0.0, %v386
    %388 = vdwg.mxu0
    %v389 = vadd.f32 %v344, %v367
    %v390 = vadd.f32 %v345, %v387
    %v391 = vtanh.pop %v389
    %v392 = vtanh.pop %v390
    %v393 = vmul.f32 %v391, 0.5
    %v394 = vmul.f32 %v392, 0.5
    %v395 = vadd.f32 %v393, 0.5
    %v396 = vadd.f32 %v394, 0.5
    %v397 = vmul.f32 %v395, %v337
    %399 = vrot.lane.b32.xlu0 %v392, 64
    %v400 = vpop.permute.xlu0 %399
    %v402 = vmul.f32 %v395, %v400
    %404 = vrot.lane.b32.xlu0 %v402, 64
    %v405 = vpop.permute.xlu0 %404
    %v407 = vadd.f32 %v397, %v405
    %v408 = vtanh.pop %v407
    %410 = vrot.lane.b32.xlu0 %v408, 64
    %v411 = vpop.permute.xlu0 %410
    %v413 = vmul.f32 %v396, %v411
    %v414 = vld [vmem:[#allocation2 + $0x30] sm:$0xff]
    %v415 = vld [vmem:[#allocation2 + $0x38] sm:$0xff]
    %v417 = vsel %vm205, %v413, 0
    %419 = vmatpush.msra.mxu0 0.0
    %420 = vmatpush.msra.mxu0 0.0
    %421 = vmatpush.msra.mxu0 0.0
    %422 = vmatpush.msra.mxu0 0.0
    %423 = vmatpush.msra.mxu0 0.0
    %424 = vmatpush.msra.mxu0 0.0
    %425 = vmatpush.msra.mxu0 0.0
    %426 = vmatpush.msra.mxu0 0.0
    %427 = vmatpush.msra.mxu0 %v203
    %428 = vmatpush.msra.mxu0 %v201
    %429 = vmatpush.msra.mxu0 %v199
    %430 = vmatpush.msra.mxu0 %v197
    %431 = vmatpush.msra.mxu0 %v195
    %432 = vmatpush.msra.mxu0 %v193
    %433 = vmatpush.msra.mxu0 %v191
    %434 = vmatpush.msra.mxu0 %v189
    %435 = vmatmul.f32.gmra.mxu0 %v417
    %v436 = vpop.f32.mrf.mxu0
    %v437 = vadd.f32 0.0, %v436
    %438 = vdwg.mxu0
    %439 = vmatpush.msra.mxu0 0.0
    %440 = vmatpush.msra.mxu0 0.0
    %441 = vmatpush.msra.mxu0 0.0
    %442 = vmatpush.msra.mxu0 0.0
    %443 = vmatpush.msra.mxu0 0.0
    %444 = vmatpush.msra.mxu0 0.0
    %445 = vmatpush.msra.mxu0 0.0
    %446 = vmatpush.msra.mxu0 0.0
    %447 = vmatpush.msra.mxu0 %v204
    %448 = vmatpush.msra.mxu0 %v202
    %449 = vmatpush.msra.mxu0 %v200
    %450 = vmatpush.msra.mxu0 %v198
    %451 = vmatpush.msra.mxu0 %v196
    %452 = vmatpush.msra.mxu0 %v194
    %453 = vmatpush.msra.mxu0 %v192
    %454 = vmatpush.msra.mxu0 %v190
    %455 = vmatmul.f32.gmra.mxu0 %v417
    %v456 = vpop.f32.mrf.mxu0
    %v457 = vadd.f32 0.0, %v456
    %458 = vdwg.mxu0
    %v459 = vadd.f32 %v414, %v437
    %v460 = vadd.f32 %v415, %v457
    %v461 = vtanh.pop %v459
    %v462 = vtanh.pop %v460
    %v463 = vmul.f32 %v461, 0.5
    %v464 = vmul.f32 %v462, 0.5
    %v465 = vadd.f32 %v463, 0.5
    %v466 = vadd.f32 %v464, 0.5
    %v467 = vmul.f32 %v465, %v407
    %469 = vrot.lane.b32.xlu0 %v462, 64
    %v470 = vpop.permute.xlu0 %469
    %v472 = vmul.f32 %v465, %v470
    %474 = vrot.lane.b32.xlu0 %v472, 64
    %v475 = vpop.permute.xlu0 %474
    %v477 = vadd.f32 %v467, %v475
    %v478 = vtanh.pop %v477
    %480 = vrot.lane.b32.xlu0 %v478, 64
    %v481 = vpop.permute.xlu0 %480
    %v483 = vmul.f32 %v466, %v481
    %v484 = vld [vmem:[#allocation2 + $0x40] sm:$0xff]
    %v485 = vld [vmem:[#allocation2 + $0x48] sm:$0xff]
    %v487 = vsel %vm205, %v483, 0
    %489 = vmatpush.msra.mxu0 0.0
    %490 = vmatpush.msra.mxu0 0.0
    %491 = vmatpush.msra.mxu0 0.0
    %492 = vmatpush.msra.mxu0 0.0
    %493 = vmatpush.msra.mxu0 0.0
    %494 = vmatpush.msra.mxu0 0.0
    %495 = vmatpush.msra.mxu0 0.0
    %496 = vmatpush.msra.mxu0 0.0
    %497 = vmatpush.msra.mxu0 %v203
    %498 = vmatpush.msra.mxu0 %v201
    %499 = vmatpush.msra.mxu0 %v199
    %500 = vmatpush.msra.mxu0 %v197
    %501 = vmatpush.msra.mxu0 %v195
    %502 = vmatpush.msra.mxu0 %v193
    %503 = vmatpush.msra.mxu0 %v191
    %504 = vmatpush.msra.mxu0 %v189
    %505 = vmatmul.f32.gmra.mxu0 %v487
    %v506 = vpop.f32.mrf.mxu0
    %v507 = vadd.f32 0.0, %v506
    %508 = vdwg.mxu0
    %509 = vmatpush.msra.mxu0 0.0
    %510 = vmatpush.msra.mxu0 0.0
    %511 = vmatpush.msra.mxu0 0.0
    %512 = vmatpush.msra.mxu0 0.0
    %513 = vmatpush.msra.mxu0 0.0
    %514 = vmatpush.msra.mxu0 0.0
    %515 = vmatpush.msra.mxu0 0.0
    %516 = vmatpush.msra.mxu0 0.0
    %517 = vmatpush.msra.mxu0 %v204
    %518 = vmatpush.msra.mxu0 %v202
    %519 = vmatpush.msra.mxu0 %v200
    %520 = vmatpush.msra.mxu0 %v198
    %521 = vmatpush.msra.mxu0 %v196
    %522 = vmatpush.msra.mxu0 %v194
    %523 = vmatpush.msra.mxu0 %v192
    %524 = vmatpush.msra.mxu0 %v190
    %525 = vmatmul.f32.gmra.mxu0 %v487
    %v526 = vpop.f32.mrf.mxu0
    %v527 = vadd.f32 0.0, %v526
    %528 = vdwg.mxu0
    %v529 = vadd.f32 %v484, %v507
    %v530 = vadd.f32 %v485, %v527
    %v531 = vtanh.pop %v529
    %v532 = vtanh.pop %v530
    %v533 = vmul.f32 %v531, 0.5
    %v534 = vmul.f32 %v532, 0.5
    %v535 = vadd.f32 %v533, 0.5
    %v536 = vadd.f32 %v534, 0.5
    %v537 = vmul.f32 %v535, %v477
    %539 = vrot.lane.b32.xlu0 %v532, 64
    %v540 = vpop.permute.xlu0 %539
    %v542 = vmul.f32 %v535, %v540
    %544 = vrot.lane.b32.xlu0 %v542, 64
    %v545 = vpop.permute.xlu0 %544
    %v547 = vadd.f32 %v537, %v545
    %v548 = vtanh.pop %v547
    %550 = vrot.lane.b32.xlu0 %v548, 64
    %v551 = vpop.permute.xlu0 %550
    %v553 = vmul.f32 %v536, %v551
    %v554 = vld [vmem:[#allocation2 + $0x50] sm:$0xff]
    %v555 = vld [vmem:[#allocation2 + $0x58] sm:$0xff]
    %v557 = vsel %vm205, %v553, 0
    %559 = vmatpush.msra.mxu0 0.0
    %560 = vmatpush.msra.mxu0 0.0
    %561 = vmatpush.msra.mxu0 0.0
    %562 = vmatpush.msra.mxu0 0.0
    %563 = vmatpush.msra.mxu0 0.0
    %564 = vmatpush.msra.mxu0 0.0
    %565 = vmatpush.msra.mxu0 0.0
    %566 = vmatpush.msra.mxu0 0.0
    %567 = vmatpush.msra.mxu0 %v203
    %568 = vmatpush.msra.mxu0 %v201
    %569 = vmatpush.msra.mxu0 %v199
    %570 = vmatpush.msra.mxu0 %v197
    %571 = vmatpush.msra.mxu0 %v195
    %572 = vmatpush.msra.mxu0 %v193
    %573 = vmatpush.msra.mxu0 %v191
    %574 = vmatpush.msra.mxu0 %v189
    %575 = vmatmul.f32.gmra.mxu0 %v557
    %v576 = vpop.f32.mrf.mxu0
    %v577 = vadd.f32 0.0, %v576
    %578 = vdwg.mxu0
    %579 = vmatpush.msra.mxu0 0.0
    %580 = vmatpush.msra.mxu0 0.0
    %581 = vmatpush.msra.mxu0 0.0
    %582 = vmatpush.msra.mxu0 0.0
    %583 = vmatpush.msra.mxu0 0.0
    %584 = vmatpush.msra.mxu0 0.0
    %585 = vmatpush.msra.mxu0 0.0
    %586 = vmatpush.msra.mxu0 0.0
    %587 = vmatpush.msra.mxu0 %v204
    %588 = vmatpush.msra.mxu0 %v202
    %589 = vmatpush.msra.mxu0 %v200
    %590 = vmatpush.msra.mxu0 %v198
    %591 = vmatpush.msra.mxu0 %v196
    %592 = vmatpush.msra.mxu0 %v194
    %593 = vmatpush.msra.mxu0 %v192
    %594 = vmatpush.msra.mxu0 %v190
    %595 = vmatmul.f32.gmra.mxu0 %v557
    %v596 = vpop.f32.mrf.mxu0
    %v597 = vadd.f32 0.0, %v596
    %598 = vdwg.mxu0
    %v599 = vadd.f32 %v554, %v577
    %v600 = vadd.f32 %v555, %v597
    %v601 = vtanh.pop %v599
    %v602 = vtanh.pop %v600
    %v603 = vmul.f32 %v601, 0.5
    %v604 = vmul.f32 %v602, 0.5
    %v605 = vadd.f32 %v603, 0.5
    %v606 = vadd.f32 %v604, 0.5
    %v607 = vmul.f32 %v605, %v547
    %609 = vrot.lane.b32.xlu0 %v602, 64
    %v610 = vpop.permute.xlu0 %609
    %v612 = vmul.f32 %v605, %v610
    %614 = vrot.lane.b32.xlu0 %v612, 64
    %v615 = vpop.permute.xlu0 %614
    %v617 = vadd.f32 %v607, %v615
    %v618 = vtanh.pop %v617
    %620 = vrot.lane.b32.xlu0 %v618, 64
    %v621 = vpop.permute.xlu0 %620
    %v623 = vmul.f32 %v606, %v621
    %v624 = vld [vmem:[#allocation2 + $0x60] sm:$0xff]
    %v625 = vld [vmem:[#allocation2 + $0x68] sm:$0xff]
    %v627 = vsel %vm205, %v623, 0
    %629 = vmatpush.msra.mxu0 0.0
    %630 = vmatpush.msra.mxu0 0.0
    %631 = vmatpush.msra.mxu0 0.0
    %632 = vmatpush.msra.mxu0 0.0
    %633 = vmatpush.msra.mxu0 0.0
    %634 = vmatpush.msra.mxu0 0.0
    %635 = vmatpush.msra.mxu0 0.0
    %636 = vmatpush.msra.mxu0 0.0
    %637 = vmatpush.msra.mxu0 %v203
    %638 = vmatpush.msra.mxu0 %v201
    %639 = vmatpush.msra.mxu0 %v199
    %640 = vmatpush.msra.mxu0 %v197
    %641 = vmatpush.msra.mxu0 %v195
    %642 = vmatpush.msra.mxu0 %v193
    %643 = vmatpush.msra.mxu0 %v191
    %644 = vmatpush.msra.mxu0 %v189
    %645 = vmatmul.f32.gmra.mxu0 %v627
    %v646 = vpop.f32.mrf.mxu0
    %v647 = vadd.f32 0.0, %v646
    %648 = vdwg.mxu0
    %649 = vmatpush.msra.mxu0 0.0
    %650 = vmatpush.msra.mxu0 0.0
    %651 = vmatpush.msra.mxu0 0.0
    %652 = vmatpush.msra.mxu0 0.0
    %653 = vmatpush.msra.mxu0 0.0
    %654 = vmatpush.msra.mxu0 0.0
    %655 = vmatpush.msra.mxu0 0.0
    %656 = vmatpush.msra.mxu0 0.0
    %657 = vmatpush.msra.mxu0 %v204
    %658 = vmatpush.msra.mxu0 %v202
    %659 = vmatpush.msra.mxu0 %v200
    %660 = vmatpush.msra.mxu0 %v198
    %661 = vmatpush.msra.mxu0 %v196
    %662 = vmatpush.msra.mxu0 %v194
    %663 = vmatpush.msra.mxu0 %v192
    %664 = vmatpush.msra.mxu0 %v190
    %665 = vmatmul.f32.gmra.mxu0 %v627
    %v666 = vpop.f32.mrf.mxu0
    %v667 = vadd.f32 0.0, %v666
    %668 = vdwg.mxu0
    %v669 = vadd.f32 %v624, %v647
    %v670 = vadd.f32 %v625, %v667
    %v671 = vtanh.pop %v669
    %v672 = vtanh.pop %v670
    %v673 = vmul.f32 %v671, 0.5
    %v674 = vmul.f32 %v672, 0.5
    %v675 = vadd.f32 %v673, 0.5
    %v676 = vadd.f32 %v674, 0.5
    %v677 = vmul.f32 %v675, %v617
    %679 = vrot.lane.b32.xlu0 %v672, 64
    %v680 = vpop.permute.xlu0 %679
    %v682 = vmul.f32 %v675, %v680
    %684 = vrot.lane.b32.xlu0 %v682, 64
    %v685 = vpop.permute.xlu0 %684
    %v687 = vadd.f32 %v677, %v685
    %v688 = vtanh.pop %v687
    %690 = vrot.lane.b32.xlu0 %v688, 64
    %v691 = vpop.permute.xlu0 %690
    %v693 = vmul.f32 %v676, %v691
    %v694 = vld [vmem:[#allocation2 + $0x70] sm:$0xff]
    %v695 = vld [vmem:[#allocation2 + $0x78] sm:$0xff]
    %v697 = vsel %vm205, %v693, 0
    %699 = vmatpush.msra.mxu0 0.0
    %700 = vmatpush.msra.mxu0 0.0
    %701 = vmatpush.msra.mxu0 0.0
    %702 = vmatpush.msra.mxu0 0.0
    %703 = vmatpush.msra.mxu0 0.0
    %704 = vmatpush.msra.mxu0 0.0
    %705 = vmatpush.msra.mxu0 0.0
    %706 = vmatpush.msra.mxu0 0.0
    %707 = vmatpush.msra.mxu0 %v203
    %708 = vmatpush.msra.mxu0 %v201
    %709 = vmatpush.msra.mxu0 %v199
    %710 = vmatpush.msra.mxu0 %v197
    %711 = vmatpush.msra.mxu0 %v195
    %712 = vmatpush.msra.mxu0 %v193
    %713 = vmatpush.msra.mxu0 %v191
    %714 = vmatpush.msra.mxu0 %v189
    %715 = vmatmul.f32.gmra.mxu0 %v697
    %v716 = vpop.f32.mrf.mxu0
    %v717 = vadd.f32 0.0, %v716
    %718 = vdwg.mxu0
    %719 = vmatpush.msra.mxu0 0.0
    %720 = vmatpush.msra.mxu0 0.0
    %721 = vmatpush.msra.mxu0 0.0
    %722 = vmatpush.msra.mxu0 0.0
    %723 = vmatpush.msra.mxu0 0.0
    %724 = vmatpush.msra.mxu0 0.0
    %725 = vmatpush.msra.mxu0 0.0
    %726 = vmatpush.msra.mxu0 0.0
    %727 = vmatpush.msra.mxu0 %v204
    %728 = vmatpush.msra.mxu0 %v202
    %729 = vmatpush.msra.mxu0 %v200
    %730 = vmatpush.msra.mxu0 %v198
    %731 = vmatpush.msra.mxu0 %v196
    %732 = vmatpush.msra.mxu0 %v194
    %733 = vmatpush.msra.mxu0 %v192
    %734 = vmatpush.msra.mxu0 %v190
    %735 = vmatmul.f32.gmra.mxu0 %v697
    %v736 = vpop.f32.mrf.mxu0
    %v737 = vadd.f32 0.0, %v736
    %738 = vdwg.mxu0
    %v739 = vadd.f32 %v694, %v717
    %v740 = vadd.f32 %v695, %v737
    %v741 = vtanh.pop %v739
    %v742 = vtanh.pop %v740
    %v743 = vmul.f32 %v741, 0.5
    %v744 = vmul.f32 %v742, 0.5
    %v745 = vadd.f32 %v743, 0.5
    %v746 = vadd.f32 %v744, 0.5
    %v747 = vmul.f32 %v745, %v687
    %749 = vrot.lane.b32.xlu0 %v742, 64
    %v750 = vpop.permute.xlu0 %749
    %v752 = vmul.f32 %v745, %v750
    %754 = vrot.lane.b32.xlu0 %v752, 64
    %v755 = vpop.permute.xlu0 %754
    %v757 = vadd.f32 %v747, %v755
    %v758 = vtanh.pop %v757
    %760 = vrot.lane.b32.xlu0 %v758, 64
    %v761 = vpop.permute.xlu0 %760
    %v763 = vmul.f32 %v746, %v761
    %v764 = vld [vmem:[%s4] sm:$0xff]
    %v765 = vld [vmem:[%s4 + $0x8] sm:$0xff]
    %v766 = vld [vmem:[%s4 + $0x10] sm:$0xff]
    %v767 = vld [vmem:[%s4 + $0x18] sm:$0xff]
    %v768 = vld [vmem:[%s4 + $0x20] sm:$0xff]
    %v769 = vld [vmem:[%s4 + $0x28] sm:$0xff]
    %v770 = vld [vmem:[%s4 + $0x30] sm:$0xff]
    %v771 = vld [vmem:[%s4 + $0x38] sm:$0xff]
    %v772 = vld [vmem:[%s5] sm:$0x1]
    %v774 = vperm.slane %v772, 0
    %v777 = vsel %vm205, %v763, 0
    %779 = vmatpush.msra.mxu0 0.0
    %780 = vmatpush.msra.mxu0 0.0
    %781 = vmatpush.msra.mxu0 0.0
    %782 = vmatpush.msra.mxu0 0.0
    %783 = vmatpush.msra.mxu0 0.0
    %784 = vmatpush.msra.mxu0 0.0
    %785 = vmatpush.msra.mxu0 0.0
    %786 = vmatpush.msra.mxu0 0.0
    %787 = vmatpush.msra.mxu0 %v771
    %788 = vmatpush.msra.mxu0 %v770
    %789 = vmatpush.msra.mxu0 %v769
    %790 = vmatpush.msra.mxu0 %v768
    %791 = vmatpush.msra.mxu0 %v767
    %792 = vmatpush.msra.mxu0 %v766
    %793 = vmatpush.msra.mxu0 %v765
    %794 = vmatpush.msra.mxu0 %v764
    %795 = vmatmul.f32.gmra.mxu0 %v777
    %v796 = vpop.f32.mrf.mxu0
    %v797 = vadd.f32 %v774, %v796
    %798 = vdwg.mxu0
    %799 = vst [vmem:[%s6] sm:$0xff] %v797
    // Predicated region
    $region30: #{time_series_model.1} parent=1 // pred_check
      _
    $region31: #{time_series_model.1} parent=1 // pred_check_branch
      %801 = sbr.rel (0) target = $region33
    $region32: #{time_series_model.1} parent=1 // pred_region
      _
    $region33: #{time_series_model.1} parent=1 // pred_fallthru
      _
    // Predicated region
    $region34: #{time_series_model.1} parent=1 // pred_check
      _
    $region35: #{time_series_model.1} parent=1 // pred_check_branch
      %803 = sbr.rel (0) target = $region37
    $region36: #{time_series_model.1} parent=1 // pred_region
      _
    $region37: #{time_series_model.1} parent=1 // pred_fallthru
      _
    %804 = vsyncpa [#allocation4], 1

</llo_original>
